<compile_context>
chip_gen: v5e
topology: v5e:2x2
jax: 0.10.0
libtpu: 0.0.40
codegen_flags: <defaults>
</compile_context>

<pallas_src>
import jax
import jax.numpy as jnp
import numpy as np
from jax.experimental import pallas as pl
from jax.experimental.pallas import tpu as pltpu


def _round_up(x, m):
    return ((x + m - 1) // m) * m


def _cdiv(a, b):
    return (a + b - 1) // b


# --------------------------------------------------------------------------- #
# Kernel
# --------------------------------------------------------------------------- #
def _bottleneck_kernel(x_ref,
                       w1_ref, b1_ref,
                       w2_ref, b2_ref,
                       w3_ref, b3_ref,
                       o_ref):
    """Fused 1x1-conv bottleneck on a (tm, Cin) row tile.

    BN scales are pre-folded into the weights; b*_ref hold the f32 BN shifts.
    Matmul operands run in the weights' dtype (bf16 by default) with f32 MXU
    accumulation; shifts / ReLU / residual add stay in f32.  The residual read
    of x_ref is deferred to the epilogue so no f32 copy of the input tile is
    live across the three matmuls.
    """
    cdt = w1_ref.dtype                                     # matmul operand dtype

    # conv1 (1x1) + bn1 + relu
    h = jnp.dot(x_ref[...].astype(cdt), w1_ref[...],
                preferred_element_type=jnp.float32)
    h = jnp.maximum(h + b1_ref[...], 0.0)

    # conv2 (1x1, stride=1) + bn2 + relu
    h = jnp.dot(h.astype(cdt), w2_ref[...],
                preferred_element_type=jnp.float32)
    h = jnp.maximum(h + b2_ref[...], 0.0)

    # conv3 (1x1) + bn3
    h = jnp.dot(h.astype(cdt), w3_ref[...],
                preferred_element_type=jnp.float32)
    h = h + b3_ref[...]

    # identity shortcut + relu (residual cast to f32 only here)
    h = h + x_ref[...].astype(jnp.float32)
    o_ref[...] = jnp.maximum(h, 0.0).astype(o_ref.dtype)


# --------------------------------------------------------------------------- #
# Capability probe: pipeline_mode=pl.Buffered(1) on constant-index specs
# --------------------------------------------------------------------------- #
_BUFFERED1_SUPPORTED = None


def _buffered1_supported():
    """One-time tiny probe; only this probe may swallow exceptions.

    The real bottleneck kernel is compiled on a single path with no exception
    guard, so scoped-VMEM OOMs or lowering bugs there are not masked.
    """
    global _BUFFERED1_SUPPORTED
    if _BUFFERED1_SUPPORTED is not None:
        return _BUFFERED1_SUPPORTED
    try:
        if not hasattr(pl, "Buffered"):
            raise NotImplementedError("pl.Buffered unavailable")
        spec = pl.BlockSpec((8, 128), lambda i: (0, 0),
                            pipeline_mode=pl.Buffered(1))

        def _probe(a_ref, o_ref):
            o_ref[...] = a_ref[...] + 1.0

        out = pl.pallas_call(
            _probe,
            out_shape=jax.ShapeDtypeStruct((8, 128), jnp.float32),
            grid=(1,),
            in_specs=[spec],
            out_specs=pl.BlockSpec((8, 128), lambda i: (0, 0)),
        )(jnp.zeros((8, 128), jnp.float32))
        jax.block_until_ready(out)
        _BUFFERED1_SUPPORTED = True
    except Exception:
        _BUFFERED1_SUPPORTED = False
    return _BUFFERED1_SUPPORTED


# --------------------------------------------------------------------------- #
# Tiling / wrapper
# --------------------------------------------------------------------------- #
def _vmem_capacity_bytes():
    try:
        return int(pltpu.get_tpu_info().vmem_capacity_bytes)
    except Exception:                 # interpret mode / older runtimes
        return 64 * 1024 * 1024       # conservative: v7x per-core VMEM


def _select_tm(M, Cin, P, Cout, io_bytes, w_bytes, vmem_budget, weights_buffers):
    """Largest row tile whose explicit working set fits the VMEM budget.

    Working set per grid step:
      * x tile        : tm*Cin*io_bytes, double-buffered
      * out tile      : tm*Cout*io_bytes, double-buffered
      * residual copy : tm*Cin*4 (f32, epilogue only but budgeted)
      * intermediates : 2 live f32 (tm, max(P, Cout)) buffers + one cast temp
      * weights+shifts: counted `weights_buffers` times (1 if Buffered(1)).
    """
    budget = int(0.85 * vmem_budget)
    weight_bytes = weights_buffers * ((Cin * P + P * P + P * Cout) * w_bytes
                                      + (2 * P + Cout) * 4)
    wide = max(P, Cout)
    per_row = (2 * Cin * io_bytes          # x tile (double buffered)
               + 2 * Cout * io_bytes       # out tile (double buffered)
               + Cin * 4                   # f32 residual copy
               + 2 * wide * 4              # f32 intermediates
               + wide * w_bytes)           # cast temporary for next matmul
    for cand in (2048, 1024, 512, 256, 128, 64, 32, 16, 8):
        if weight_bytes + cand * per_row <= budget:
            return cand
    return 8


def _bottleneck_rows(x2d, params, *, tm=None):
    """Run the fused bottleneck on (M, Cin) rows; returns (M, Cout) in x2d.dtype."""
    M, Cin = x2d.shape
    P = params["w1"].shape[1]            # possibly lane-padded planes
    Cout = params["w3"].shape[1]
    assert Cout == Cin, "identity shortcut requires inplanes == planes*4"

    io_bytes = jnp.dtype(x2d.dtype).itemsize
    w_bytes = jnp.dtype(params["w1"].dtype).itemsize

    vmem_cap = _vmem_capacity_bytes()
    # ~0.9 of detected per-core VMEM; no artificial 64 MiB cap on v5e/v6e.
    vmem_limit = min(int(0.9 * vmem_cap), 128 * 1024 * 1024)

    single_buf_weights = _buffered1_supported()
    weights_buffers = 1 if single_buf_weights else 2

    if tm is None:
        tm = _select_tm(M, Cin, P, Cout, io_bytes, w_bytes,
                        vmem_limit, weights_buffers)
    # Keep the 1-D grid multi-step so v7x's two TensorCores both get work
    # (near-zero cost on single-TC v5e/v6e; per-step overhead ~0.35 us).
    min_steps = 8
    tm = min(tm, max(128, _round_up(_cdiv(M, min_steps), 8)))
    tm = _round_up(min(tm, _round_up(M, 8)), 8)

    # Pad rows to a multiple of tm (tail handled by padding, not an assert).
    Mpad = _round_up(M, tm)
    if Mpad != M:
        x2d = jnp.pad(x2d, ((0, Mpad - M), (0, 0)))
    grid = (Mpad // tm,)

    flops = 2 * Mpad * (Cin * P + P * P + P * Cout)
    bytes_accessed = (Mpad * Cin * io_bytes + Mpad * Cout * io_bytes
                      + (Cin * P + P * P + P * Cout) * w_bytes
                      + (2 * P + Cout) * 4)
    cost = pl.CostEstimate(flops=flops, transcendentals=0,
                           bytes_accessed=bytes_accessed)
    compiler_params = pltpu.CompilerParams(
        dimension_semantics=("parallel",),
        vmem_limit_bytes=vmem_limit,
    )

    def const_spec(r, c):
        # Constant index_map -> weights never re-fetched across the grid;
        # single-buffer them when the build supports it so the resident
        # weights don't double their VMEM footprint.
        if single_buf_weights:
            return pl.BlockSpec((r, c), lambda i: (0, 0),
                                pipeline_mode=pl.Buffered(1))
        return pl.BlockSpec((r, c), lambda i: (0, 0))

    out2d = pl.pallas_call(
        _bottleneck_kernel,
        out_shape=jax.ShapeDtypeStruct((Mpad, Cout), x2d.dtype),
        grid_spec=pltpu.PrefetchScalarGridSpec(
            num_scalar_prefetch=0,
            grid=grid,
            in_specs=[
                pl.BlockSpec((tm, Cin), lambda i: (i, 0)),     # x rows
                const_spec(Cin, P), const_spec(1, P),          # conv1' / shift1
                const_spec(P, P), const_spec(1, P),            # conv2' / shift2
                const_spec(P, Cout), const_spec(1, Cout),      # conv3' / shift3
            ],
            out_specs=pl.BlockSpec((tm, Cout), lambda i: (i, 0)),
        ),
        compiler_params=compiler_params,
        cost_estimate=cost,
    )(x2d,
      params["w1"], params["b1"],
      params["w2"], params["b2"],
      params["w3"], params["b3"])

    return out2d[:M] if Mpad != M else out2d


def bottleneck_pallas_nhwc(x_nhwc, params, *, tm=None, io_dtype=jnp.bfloat16):
    """Preferred entry point: NHWC in/out, activations shipped in io_dtype (bf16)."""
    N, H, W, Cin = x_nhwc.shape
    x2d = x_nhwc.reshape(-1, Cin).astype(io_dtype)
    out2d = _bottleneck_rows(x2d, params, tm=tm)
    return out2d.reshape(N, H, W, -1)


def bottleneck_pallas(x_nchw, params, *, tm=None, io_dtype=jnp.bfloat16):
    """PyTorch-layout (NCHW) convenience wrapper.

    The two transposes are extra full-tensor HBM passes; keep the surrounding
    model in NHWC and use bottleneck_pallas_nhwc when possible.
    """
    x_nhwc = jnp.transpose(x_nchw, (0, 2, 3, 1))
    out_nhwc = bottleneck_pallas_nhwc(x_nhwc, params, tm=tm, io_dtype=io_dtype)
    return jnp.transpose(out_nhwc, (0, 3, 1, 2))


# --------------------------------------------------------------------------- #
# Parameters & reference
# --------------------------------------------------------------------------- #
def make_params(key, inplanes, planes, eps=1e-5):
    """Random Bottleneck params (f32, unpadded) with inference-mode BN folded in.

    Feed these to bottleneck_reference; call prepare_params(...) to get the
    kernel-ready (lane-padded, bf16) weights.
    """
    expansion = 4
    keys = jax.random.split(key, 15)
    f = jnp.float32

    def conv_w(k, cin, cout):
        # torch Conv2d 1x1 weight is (cout, cin, 1, 1); stored here as (cin, cout).
        w = jax.random.normal(k, (cout, cin), dtype=f) * 0.1
        return jnp.transpose(w, (1, 0))

    def bn(k0, k1, k2, k3, c):
        gamma = 1.0 + 0.1 * jax.random.normal(k0, (c,), dtype=f)
        beta = 0.1 * jax.random.normal(k1, (c,), dtype=f)
        mean = 0.1 * jax.random.normal(k2, (c,), dtype=f)
        var = jax.random.uniform(k3, (c,), dtype=f, minval=0.5, maxval=1.5)
        scale = gamma / jnp.sqrt(var + eps)
        shift = beta - mean * scale
        return scale, shift

    w1 = conv_w(keys[0], inplanes, planes)
    w2 = conv_w(keys[1], planes, planes)
    w3 = conv_w(keys[2], planes, planes * expansion)
    s1, b1 = bn(keys[3], keys[4], keys[5], keys[6], planes)
    s2, b2 = bn(keys[7], keys[8], keys[9], keys[10], planes)
    s3, b3 = bn(keys[11], keys[12], keys[13], keys[14], planes * expansion)

    # Fold BN scale into the conv weights (per output channel); keep shifts.
    return dict(
        w1=(w1 * s1[None, :]).astype(f), b1=b1[None, :].astype(f),
        w2=(w2 * s2[None, :]).astype(f), b2=b2[None, :].astype(f),
        w3=(w3 * s3[None, :]).astype(f), b3=b3[None, :].astype(f),
    )


def prepare_params(params, *, compute_dtype=jnp.bfloat16, lane_pad=True):
    """Kernel-ready params: zero-pad planes P to a multiple of 128 (lane width)
    and cast matmul weights to compute_dtype (shifts stay f32).

    Padded channels are exact zeros through relu and contribute nothing to the
    output; Cout is unchanged.
    """
    w1, b1 = params["w1"], params["b1"]
    w2, b2 = params["w2"], params["b2"]
    w3, b3 = params["w3"], params["b3"]
    P = w1.shape[1]
    Ppad = _round_up(P, 128) if lane_pad else P
    if Ppad != P:
        pad = Ppad - P
        w1 = jnp.pad(w1, ((0, 0), (0, pad)))
        b1 = jnp.pad(b1, ((0, 0), (0, pad)))
        w2 = jnp.pad(w2, ((0, pad), (0, pad)))
        b2 = jnp.pad(b2, ((0, 0), (0, pad)))
        w3 = jnp.pad(w3, ((0, pad), (0, 0)))
    f = jnp.float32
    return dict(
        w1=w1.astype(compute_dtype), b1=b1.astype(f),
        w2=w2.astype(compute_dtype), b2=b2.astype(f),
        w3=w3.astype(compute_dtype), b3=b3.astype(f),
    )


def bottleneck_reference(x_nchw, p):
    """Pure-JAX f32 reference of the same forward pass (for validation)."""
    N, Cin, H, W = x_nchw.shape
    x2d = jnp.transpose(x_nchw, (0, 2, 3, 1)).reshape(-1, Cin).astype(jnp.float32)
    h = jnp.maximum(x2d @ p["w1"].astype(jnp.float32) + p["b1"], 0.0)
    h = jnp.maximum(h @ p["w2"].astype(jnp.float32) + p["b2"], 0.0)
    h = h @ p["w3"].astype(jnp.float32) + p["b3"]
    h = jnp.maximum(h + x2d, 0.0)
    Cout = h.shape[-1]
    return jnp.transpose(h.reshape(N, H, W, Cout), (0, 3, 1, 2))


# --------------------------------------------------------------------------- #
# Test
# --------------------------------------------------------------------------- #
if __name__ == "__main__":
    planes = 4
    inplanes = planes * 4          # identity shortcut requires inplanes == planes*4
    N, H, W = 2, 16, 16

    key = jax.random.PRNGKey(0)
    kx, kp = jax.random.split(key)
    x = jax.random.normal(kx, (N, inplanes, H, W), dtype=jnp.float32)
    params_ref = make_params(kp, inplanes, planes)   # f32, unpadded (reference)

    ref = bottleneck_reference(x, params_ref)

    # Exact path: f32 I/O, f32 MXU operands, lane-padded weights — tight tol.
    params_f32 = prepare_params(params_ref, compute_dtype=jnp.float32)
    out_f32 = jax.block_until_ready(
        bottleneck_pallas(x, params_f32, io_dtype=jnp.float32))
    np.testing.assert_allclose(np.asarray(out_f32), np.asarray(ref),
                               rtol=1e-5, atol=1e-5)

    # Default fast path: bf16 activation I/O + bf16 MXU operands (f32 accum,
    # f32 epilogue/residual) — looser tolerance vs the f32 reference.
    params_bf16 = prepare_params(params_ref)         # bf16 weights, lane-padded
    out_bf16 = jax.block_until_ready(bottleneck_pallas(x, params_bf16))
    np.testing.assert_allclose(np.asarray(out_bf16.astype(jnp.float32)),
                               np.asarray(ref), rtol=3e-2, atol=3e-2)

    print("KERNEL_OK")
</pallas_src>

<mosaic_0001>
module attributes {stable_mosaic.version = 11 : i64} {
  func.func @_probe(%arg0: i32, %arg1: memref<8x128xf32, #tpu.memory_space<vmem>>, %arg2: memref<8x128xf32, #tpu.memory_space<vmem>>) attributes {dimension_semantics = [#tpu.dimension_semantics<arbitrary>], iteration_bounds = array<i64: 1>, scalar_prefetch = 0 : i64, scratch_operands = 0 : i64, tpu.core_type = #tpu.core_type<tc>, window_params = [{pipeline_mode = #tpu.pipeline_mode<synchronous>, transform_indices = @transform_0, window_bounds = array<i64: 8, 128>}, {pipeline_mode = #tpu.pipeline_mode<synchronous>, transform_indices = @transform_1, window_bounds = array<i64: 8, 128>}]} {
    %c0 = arith.constant 0 : index
    %c0_0 = arith.constant 0 : index
    %0 = vector.load %arg1[%c0, %c0_0] : memref<8x128xf32, #tpu.memory_space<vmem>>, vector<8x128xf32>
    %cst = arith.constant 1.000000e+00 : f32
    %1 = vector.broadcast %cst : f32 to vector<8x128xf32>
    %2 = arith.addf %0, %1 : vector<8x128xf32>
    %c0_1 = arith.constant 0 : index
    %c0_2 = arith.constant 0 : index
    %3 = vector.load %arg2[%c0_1, %c0_2] : memref<8x128xf32, #tpu.memory_space<vmem>>, vector<8x128xf32>
    tpu.vector_store %arg2[%c0_1, %c0_2], %2 {strides = array<i32>} : memref<8x128xf32, #tpu.memory_space<vmem>>, vector<8x128xf32>,
    return
  }
  func.func @transform_0(%arg0: i32) -> (i32, i32) {
    %c0_i32 = arith.constant 0 : i32
    %c0_i32_0 = arith.constant 0 : i32
    %c0_i32_1 = arith.constant 0 : i32
    return %c0_i32, %c0_i32_0 : i32, i32
  }
  func.func @transform_1(%arg0: i32) -> (i32, i32) {
    %c0_i32 = arith.constant 0 : i32
    %c0_i32_0 = arith.constant 0 : i32
    %c0_i32_1 = arith.constant 0 : i32
    return %c0_i32, %c0_i32_0 : i32, i32
  }
}

module attributes {stable_mosaic.version = 11 : i64} {
  func.func @_bottleneck_kernel(%arg0: i32, %arg1: memref<128x16xf32, #tpu.memory_space<vmem>>, %arg2: memref<16x128xf32, #tpu.memory_space<vmem>>, %arg3: memref<1x128xf32, #tpu.memory_space<vmem>>, %arg4: memref<128x128xf32, #tpu.memory_space<vmem>>, %arg5: memref<1x128xf32, #tpu.memory_space<vmem>>, %arg6: memref<128x16xf32, #tpu.memory_space<vmem>>, %arg7: memref<1x16xf32, #tpu.memory_space<vmem>>, %arg8: memref<128x16xf32, #tpu.memory_space<vmem>>) attributes {dimension_semantics = [#tpu.dimension_semantics<parallel>], iteration_bounds = array<i64: 4>, scalar_prefetch = 0 : i64, scratch_operands = 0 : i64, tpu.core_type = #tpu.core_type<tc>, window_params = [{transform_indices = @transform_0, window_bounds = array<i64: 128, 16>}, {pipeline_mode = #tpu.pipeline_mode<synchronous>, transform_indices = @transform_1, window_bounds = array<i64: 16, 128>}, {pipeline_mode = #tpu.pipeline_mode<synchronous>, transform_indices = @transform_2, window_bounds = array<i64: 1, 128>}, {pipeline_mode = #tpu.pipeline_mode<synchronous>, transform_indices = @transform_3, window_bounds = array<i64: 128, 128>}, {pipeline_mode = #tpu.pipeline_mode<synchronous>, transform_indices = @transform_4, window_bounds = array<i64: 1, 128>}, {pipeline_mode = #tpu.pipeline_mode<synchronous>, transform_indices = @transform_5, window_bounds = array<i64: 128, 16>}, {pipeline_mode = #tpu.pipeline_mode<synchronous>, transform_indices = @transform_6, window_bounds = array<i64: 1, 16>}, {transform_indices = @transform_7, window_bounds = array<i64: 128, 16>}]} {
    %c0 = arith.constant 0 : index
    %c0_0 = arith.constant 0 : index
    %0 = vector.load %arg1[%c0, %c0_0] : memref<128x16xf32, #tpu.memory_space<vmem>>, vector<128x16xf32>
    %c0_1 = arith.constant 0 : index
    %c0_2 = arith.constant 0 : index
    %1 = vector.load %arg2[%c0_1, %c0_2] : memref<16x128xf32, #tpu.memory_space<vmem>>, vector<16x128xf32>
    %cst = arith.constant dense<0.000000e+00> : vector<128x128xf32>
    %2 = tpu.matmul %0, %1, %cst {dimension_numbers = #tpu.dot_dimension_numbers<[1], [0], [0], [1], [0, 0, 1, 1], [], []>} : vector<128x16xf32>, vector<16x128xf32>, vector<128x128xf32> -> vector<128x128xf32>
    %c0_3 = arith.constant 0 : index
    %c0_4 = arith.constant 0 : index
    %3 = vector.load %arg3[%c0_3, %c0_4] : memref<1x128xf32, #tpu.memory_space<vmem>>, vector<1x128xf32>
    %4 = vector.broadcast %3 : vector<1x128xf32> to vector<128x128xf32>
    %5 = arith.addf %2, %4 : vector<128x128xf32>
    %cst_5 = arith.constant 0.000000e+00 : f32
    %6 = vector.broadcast %cst_5 : f32 to vector<128x128xf32>
    %7 = arith.maximumf %5, %6 : vector<128x128xf32>
    %c0_6 = arith.constant 0 : index
    %c0_7 = arith.constant 0 : index
    %8 = vector.load %arg4[%c0_6, %c0_7] : memref<128x128xf32, #tpu.memory_space<vmem>>, vector<128x128xf32>
    %cst_8 = arith.constant dense<0.000000e+00> : vector<128x128xf32>
    %9 = tpu.matmul %7, %8, %cst_8 {dimension_numbers = #tpu.dot_dimension_numbers<[1], [0], [0], [1], [0, 0, 1, 1], [], []>} : vector<128x128xf32>, vector<128x128xf32>, vector<128x128xf32> -> vector<128x128xf32>
    %c0_9 = arith.constant 0 : index
    %c0_10 = arith.constant 0 : index
    %10 = vector.load %arg5[%c0_9, %c0_10] : memref<1x128xf32, #tpu.memory_space<vmem>>, vector<1x128xf32>
    %11 = vector.broadcast %10 : vector<1x128xf32> to vector<128x128xf32>
    %12 = arith.addf %9, %11 : vector<128x128xf32>
    %cst_11 = arith.constant 0.000000e+00 : f32
    %13 = vector.broadcast %cst_11 : f32 to vector<128x128xf32>
    %14 = arith.maximumf %12, %13 : vector<128x128xf32>
    %c0_12 = arith.constant 0 : index
    %c0_13 = arith.constant 0 : index
    %15 = vector.load %arg6[%c0_12, %c0_13] : memref<128x16xf32, #tpu.memory_space<vmem>>, vector<128x16xf32>
    %cst_14 = arith.constant dense<0.000000e+00> : vector<128x16xf32>
    %16 = tpu.matmul %14, %15, %cst_14 {dimension_numbers = #tpu.dot_dimension_numbers<[1], [0], [0], [1], [0, 0, 1, 1], [], []>} : vector<128x128xf32>, vector<128x16xf32>, vector<128x16xf32> -> vector<128x16xf32>
    %c0_15 = arith.constant 0 : index
    %c0_16 = arith.constant 0 : index
    %17 = vector.load %arg7[%c0_15, %c0_16] : memref<1x16xf32, #tpu.memory_space<vmem>>, vector<1x16xf32>
    %18 = vector.broadcast %17 : vector<1x16xf32> to vector<128x16xf32>
    %19 = arith.addf %16, %18 : vector<128x16xf32>
    %c0_17 = arith.constant 0 : index
    %c0_18 = arith.constant 0 : index
    %20 = vector.load %arg1[%c0_17, %c0_18] : memref<128x16xf32, #tpu.memory_space<vmem>>, vector<128x16xf32>
    %21 = arith.addf %19, %20 : vector<128x16xf32>
    %cst_19 = arith.constant 0.000000e+00 : f32
    %22 = vector.broadcast %cst_19 : f32 to vector<128x16xf32>
    %23 = arith.maximumf %21, %22 : vector<128x16xf32>
    %c0_20 = arith.constant 0 : index
    %c0_21 = arith.constant 0 : index
    %24 = vector.load %arg8[%c0_20, %c0_21] : memref<128x16xf32, #tpu.memory_space<vmem>>, vector<128x16xf32>
    tpu.vector_store %arg8[%c0_20, %c0_21], %23 {strides = array<i32>} : memref<128x16xf32, #tpu.memory_space<vmem>>, vector<128x16xf32>,
    return
  }
  func.func @transform_0(%arg0: i32) -> (i32, i32) {
    %c0_i32 = arith.constant 0 : i32
    %c0_i32_0 = arith.constant 0 : i32
    return %arg0, %c0_i32 : i32, i32
  }
  func.func @transform_1(%arg0: i32) -> (i32, i32) {
    %c0_i32 = arith.constant 0 : i32
    %c0_i32_0 = arith.constant 0 : i32
    %c0_i32_1 = arith.constant 0 : i32
    return %c0_i32, %c0_i32_0 : i32, i32
  }
  func.func @transform_2(%arg0: i32) -> (i32, i32) {
    %c0_i32 = arith.constant 0 : i32
    %c0_i32_0 = arith.constant 0 : i32
    %c0_i32_1 = arith.constant 0 : i32
    return %c0_i32, %c0_i32_0 : i32, i32
  }
  func.func @transform_3(%arg0: i32) -> (i32, i32) {
    %c0_i32 = arith.constant 0 : i32
    %c0_i32_0 = arith.constant 0 : i32
    %c0_i32_1 = arith.constant 0 : i32
    return %c0_i32, %c0_i32_0 : i32, i32
  }
  func.func @transform_4(%arg0: i32) -> (i32, i32) {
    %c0_i32 = arith.constant 0 : i32
    %c0_i32_0 = arith.constant 0 : i32
    %c0_i32_1 = arith.constant 0 : i32
    return %c0_i32, %c0_i32_0 : i32, i32
  }
  func.func @transform_5(%arg0: i32) -> (i32, i32) {
    %c0_i32 = arith.constant 0 : i32
    %c0_i32_0 = arith.constant 0 : i32
    %c0_i32_1 = arith.constant 0 : i32
    return %c0_i32, %c0_i32_0 : i32, i32
  }
  func.func @transform_6(%arg0: i32) -> (i32, i32) {
    %c0_i32 = arith.constant 0 : i32
    %c0_i32_0 = arith.constant 0 : i32
    %c0_i32_1 = arith.constant 0 : i32
    return %c0_i32, %c0_i32_0 : i32, i32
  }
  func.func @transform_7(%arg0: i32) -> (i32, i32) {
    %c0_i32 = arith.constant 0 : i32
    %c0_i32_0 = arith.constant 0 : i32
    return %arg0, %c0_i32 : i32, i32
  }
}

</mosaic_0001>

<llo_original>
// kernel: tpu_custom_call.1
$region0: #{tpu_custom_call.1}
  #allocation0 [shape = 'u32[]', space=smem, size = 0x4, offset = 0x4, fixed_abs, tag = 'smem constant byte address 0x4 - core index']
  #allocation1 [shape = 'u32[72,128]{1,0:T(1,128)}', space=vmem, size = 0x9000, scoped, tag = 'internal scratch']
  %s0 = inlined_call_operand.hbm [shape: f32[8,128], index: 0, kind: input, shape index: {}]
  %s1 = inlined_call_operand.hbm [shape: f32[8,128], index: 1, kind: output, shape index: {}]
  %s2 = sld [smem:[#allocation0]]
  $region18: #{tpu_custom_call.1} parent=0
    _
  %s4 = ssub.s32 1, %s2
  %s5 = scalar_select 0, %s4, %s2
  $region1: #{tpu_custom_call.1} parent=0
    #allocation2 [shape = 'u8[4096]{0}', space=vmem, size = 0x1000, scoped, tag = 'input window, operand 0, single buffered']
    #allocation3 [shape = 's32[1]{0}', space=sflag, size = 0x4, scoped, tag = 'scoped memory for tpu_custom_call.1']
    #allocation4 [shape = 's32[1]{0}', space=sflag, size = 0x4, scoped, tag = 'scoped memory for tpu_custom_call.1']
    #allocation5 [shape = 'u8[4096]{0}', space=vmem, size = 0x1000, scoped, tag = 'output window, operand 0, single buffered']
    %6 = vsyncpa [#allocation3], 0
    %7 = vsyncpa [#allocation4], 0
    // Predicated region
    $region2: #{tpu_custom_call.1} parent=1 // pred_check
      _
    $region3: #{tpu_custom_call.1} parent=1 // pred_check_branch
      %9 = sbr.rel (0) target = $region5
    $region4: #{tpu_custom_call.1} parent=1 // pred_region
      %11 = vsyncadd [#allocation3], 0
      %s13 = sshll.u32 %s0, 4
      %s14 = int_to_ptr.hbm [resolvable:$true] %s13
      %s15 = sshll.u32 [#allocation2], 4
      %s16 = int_to_ptr.vmem [resolvable:$true] %s15
      %18 = dma.hbm_to_vmem [thread:$0]  %s14, 128, %s16, [#allocation3]
    $region5: #{tpu_custom_call.1} parent=1 // pred_fallthru
      _
    // Predicated region
    $region6: #{tpu_custom_call.1} parent=1 // pred_check
      _
    $region7: #{tpu_custom_call.1} parent=1 // pred_check_branch
      %20 = sbr.rel (0) target = $region9
    $region8: #{tpu_custom_call.1} parent=1 // pred_region
      %22 = dma.done [#allocation3], 128
    $region9: #{tpu_custom_call.1} parent=1 // pred_fallthru
      _
    %v23 = vld [vmem:[#allocation2] sm:$0xff]
    %v24 = vadd.f32 %v23, 1.0
    %25 = vst [vmem:[#allocation5] sm:$0xff] %v24
    // Predicated region
    $region10: #{tpu_custom_call.1} parent=1 // pred_check
      _
    $region11: #{tpu_custom_call.1} parent=1 // pred_check_branch
      %27 = sbr.rel (0) target = $region13
    $region12: #{tpu_custom_call.1} parent=1 // pred_region
      %29 = vsyncadd [#allocation4], 0
      %s31 = sshll.u32 [#allocation5], 4
      %s32 = int_to_ptr.vmem [resolvable:$true] %s31
      %s33 = sshll.u32 %s1, 4
      %s34 = int_to_ptr.hbm [resolvable:$true] %s33
      %36 = dma.vmem_to_hbm [thread:$0]  %s32, 128, %s34, [#allocation4]
    $region13: #{tpu_custom_call.1} parent=1 // pred_fallthru
      _
    // Predicated region
    $region14: #{tpu_custom_call.1} parent=1 // pred_check
      _
    $region15: #{tpu_custom_call.1} parent=1 // pred_check_branch
      %38 = sbr.rel (0) target = $region17
    $region16: #{tpu_custom_call.1} parent=1 // pred_region
      %40 = dma.done [#allocation4], 128
    $region17: #{tpu_custom_call.1} parent=1 // pred_fallthru
      _
    %41 = vsyncpa [#allocation3], 1
    %42 = vsyncpa [#allocation4], 1

// kernel: tpu_custom_call.1
$region0: #{tpu_custom_call.1}
  #allocation0 [shape = 'u32[]', space=smem, size = 0x4, offset = 0x4, fixed_abs, tag = 'smem constant byte address 0x4 - core index']
  #allocation1 [shape = 'u32[72,128]{1,0:T(1,128)}', space=vmem, size = 0x9000, scoped, tag = 'internal scratch']
  %s0 = inlined_call_operand.vmem [shape: f32[512,16], index: 0, kind: input, shape index: {}]
  %s1 = inlined_call_operand.vmem [shape: f32[16,128], index: 1, kind: input, shape index: {}]
  %s2 = inlined_call_operand.vmem [shape: f32[1,128], index: 2, kind: input, shape index: {}]
  %s3 = inlined_call_operand.vmem [shape: f32[128,128], index: 3, kind: input, shape index: {}]
  %s4 = inlined_call_operand.vmem [shape: f32[1,128], index: 4, kind: input, shape index: {}]
  %s5 = inlined_call_operand.vmem [shape: f32[128,16], index: 5, kind: input, shape index: {}]
  %s6 = inlined_call_operand.vmem [shape: f32[1,16], index: 6, kind: input, shape index: {}]
  %s7 = inlined_call_operand.vmem [shape: f32[512,16], index: 7, kind: output, shape index: {}]
  %s8 = sld [smem:[#allocation0]]
  $region61: #{tpu_custom_call.1} parent=0
    _
  %s10 = ssub.s32 1, %s8
  %s11 = scalar_select 0, %s10, %s8
  loop: start=0, step=1, limit=6
  $region2: #{tpu_custom_call.1} parent=0 // loop_pre_header
    _
  $region3: #{tpu_custom_call.1} parent=0 // loop_header
    %s13 = sphi 0, %s17
    %p14 = scmp.ge.s32.totalorder %s13, 6
    %s23 = sphi 0, %s25
    %s26 = sphi 0, %s23
    %s27 = sphi 0, %s26
    %s43 = sphi 0, %s27
    %s47 = sphi 0, %s47
    %s49 = sphi 0, %s47
    %s50 = sphi 0, %s49
    %s64 = sphi 0, %s50
    %s68 = sphi 0, %s68
    %s70 = sphi 0, %s68
    %s71 = sphi 0, %s70
    %s85 = sphi 0, %s71
    %s89 = sphi 0, %s89
    %s91 = sphi 0, %s89
    %s92 = sphi 0, %s91
    %s106 = sphi 0, %s92
    %s110 = sphi 0, %s110
    %s112 = sphi 0, %s110
    %s113 = sphi 0, %s112
    %s127 = sphi 0, %s113
    %s131 = sphi 0, %s131
    %s133 = sphi 0, %s131
    %s134 = sphi 0, %s133
    %s148 = sphi 0, %s134
    %s152 = sphi 0, %s152
    %s154 = sphi 0, %s152
    %s155 = sphi 0, %s154
    %s169 = sphi 0, %s155
    %s175 = sphi 0, %s177
    %s178 = sphi 0, %s175
    %s179 = sphi 0, %s178
    %s195 = sphi 0, %s179
  $region4: #{tpu_custom_call.1} parent=0 // loop_header_branch
    %16 = sbr.rel (%p14) target = $region8
  $region5: #{tpu_custom_call.1} parent=0 // loop_body
    %s18 = ssub.s32 %s13, 1
    %s19 = ssub.s32 %s13, 2
    %s20 = sadd.s32 %s13, 1
    %s21 = ssub.s32 %s13, %s20
    %p22 = scmp.eq.s32.totalorder %s21, 0
    %s24 = sadd.s32 %s23, 1
    %s25 = scalar_select %p22, %s23, %s24
    %p28 = pneg %p22
    %p29 = scmp.eq.s32.totalorder %s13, 3
    %p30 = por %p28, %p29
    %p31 = scmp.ne.s32.totalorder %s23, %s26
    %p32 = scmp.eq.s32.totalorder %s13, 0
    %p33 = por %p31, %p32
    %p34 = scmp.ne.s32.totalorder %s23, %s26
    %p35 = scmp.eq.s32.totalorder %s18, 3
    %p36 = por %p34, %p35
    %p37 = scmp.ne.s32.totalorder %s26, %s27
    %p38 = scmp.eq.s32.totalorder %s18, 0
    %p39 = por %p37, %p38
    %p40 = scmp.ne.s32.totalorder %s26, %s27
    %p41 = scmp.eq.s32.totalorder %s19, 3
    %p42 = por %p40, %p41
    %p44 = scmp.ne.s32.totalorder %s27, %s43
    %p45 = scmp.eq.s32.totalorder %s19, 0
    %p46 = por %p44, %p45
    %s48 = sadd.s32 %s47, 1
    %p51 = scmp.eq.s32.totalorder %s13, 3
    %p52 = scmp.ne.s32.totalorder %s47, %s49
    %p53 = scmp.eq.s32.totalorder %s13, 0
    %p54 = por %p52, %p53
    %p55 = scmp.ne.s32.totalorder %s47, %s49
    %p56 = scmp.eq.s32.totalorder %s18, 3
    %p57 = por %p55, %p56
    %p58 = scmp.ne.s32.totalorder %s49, %s50
    %p59 = scmp.eq.s32.totalorder %s18, 0
    %p60 = por %p58, %p59
    %p61 = scmp.ne.s32.totalorder %s49, %s50
    %p62 = scmp.eq.s32.totalorder %s19, 3
    %p63 = por %p61, %p62
    %p65 = scmp.ne.s32.totalorder %s50, %s64
    %p66 = scmp.eq.s32.totalorder %s19, 0
    %p67 = por %p65, %p66
    %s69 = sadd.s32 %s68, 1
    %p72 = scmp.eq.s32.totalorder %s13, 3
    %p73 = scmp.ne.s32.totalorder %s68, %s70
    %p74 = scmp.eq.s32.totalorder %s13, 0
    %p75 = por %p73, %p74
    %p76 = scmp.ne.s32.totalorder %s68, %s70
    %p77 = scmp.eq.s32.totalorder %s18, 3
    %p78 = por %p76, %p77
    %p79 = scmp.ne.s32.totalorder %s70, %s71
    %p80 = scmp.eq.s32.totalorder %s18, 0
    %p81 = por %p79, %p80
    %p82 = scmp.ne.s32.totalorder %s70, %s71
    %p83 = scmp.eq.s32.totalorder %s19, 3
    %p84 = por %p82, %p83
    %p86 = scmp.ne.s32.totalorder %s71, %s85
    %p87 = scmp.eq.s32.totalorder %s19, 0
    %p88 = por %p86, %p87
    %s90 = sadd.s32 %s89, 1
    %p93 = scmp.eq.s32.totalorder %s13, 3
    %p94 = scmp.ne.s32.totalorder %s89, %s91
    %p95 = scmp.eq.s32.totalorder %s13, 0
    %p96 = por %p94, %p95
    %p97 = scmp.ne.s32.totalorder %s89, %s91
    %p98 = scmp.eq.s32.totalorder %s18, 3
    %p99 = por %p97, %p98
    %p100 = scmp.ne.s32.totalorder %s91, %s92
    %p101 = scmp.eq.s32.totalorder %s18, 0
    %p102 = por %p100, %p101
    %p103 = scmp.ne.s32.totalorder %s91, %s92
    %p104 = scmp.eq.s32.totalorder %s19, 3
    %p105 = por %p103, %p104
    %p107 = scmp.ne.s32.totalorder %s92, %s106
    %p108 = scmp.eq.s32.totalorder %s19, 0
    %p109 = por %p107, %p108
    %s111 = sadd.s32 %s110, 1
    %p114 = scmp.eq.s32.totalorder %s13, 3
    %p115 = scmp.ne.s32.totalorder %s110, %s112
    %p116 = scmp.eq.s32.totalorder %s13, 0
    %p117 = por %p115, %p116
    %p118 = scmp.ne.s32.totalorder %s110, %s112
    %p119 = scmp.eq.s32.totalorder %s18, 3
    %p120 = por %p118, %p119
    %p121 = scmp.ne.s32.totalorder %s112, %s113
    %p122 = scmp.eq.s32.totalorder %s18, 0
    %p123 = por %p121, %p122
    %p124 = scmp.ne.s32.totalorder %s112, %s113
    %p125 = scmp.eq.s32.totalorder %s19, 3
    %p126 = por %p124, %p125
    %p128 = scmp.ne.s32.totalorder %s113, %s127
    %p129 = scmp.eq.s32.totalorder %s19, 0
    %p130 = por %p128, %p129
    %s132 = sadd.s32 %s131, 1
    %p135 = scmp.eq.s32.totalorder %s13, 3
    %p136 = scmp.ne.s32.totalorder %s131, %s133
    %p137 = scmp.eq.s32.totalorder %s13, 0
    %p138 = por %p136, %p137
    %p139 = scmp.ne.s32.totalorder %s131, %s133
    %p140 = scmp.eq.s32.totalorder %s18, 3
    %p141 = por %p139, %p140
    %p142 = scmp.ne.s32.totalorder %s133, %s134
    %p143 = scmp.eq.s32.totalorder %s18, 0
    %p144 = por %p142, %p143
    %p145 = scmp.ne.s32.totalorder %s133, %s134
    %p146 = scmp.eq.s32.totalorder %s19, 3
    %p147 = por %p145, %p146
    %p149 = scmp.ne.s32.totalorder %s134, %s148
    %p150 = scmp.eq.s32.totalorder %s19, 0
    %p151 = por %p149, %p150
    %s153 = sadd.s32 %s152, 1
    %p156 = scmp.eq.s32.totalorder %s13, 3
    %p157 = scmp.ne.s32.totalorder %s152, %s154
    %p158 = scmp.eq.s32.totalorder %s13, 0
    %p159 = por %p157, %p158
    %p160 = scmp.ne.s32.totalorder %s152, %s154
    %p161 = scmp.eq.s32.totalorder %s18, 3
    %p162 = por %p160, %p161
    %p163 = scmp.ne.s32.totalorder %s154, %s155
    %p164 = scmp.eq.s32.totalorder %s18, 0
    %p165 = por %p163, %p164
    %p166 = scmp.ne.s32.totalorder %s154, %s155
    %p167 = scmp.eq.s32.totalorder %s19, 3
    %p168 = por %p166, %p167
    %p170 = scmp.ne.s32.totalorder %s155, %s169
    %p171 = scmp.eq.s32.totalorder %s19, 0
    %p172 = por %p170, %p171
    %s173 = ssub.s32 %s13, %s20
    %p174 = scmp.eq.s32.totalorder %s173, 0
    %s176 = sadd.s32 %s175, 1
    %s177 = scalar_select %p174, %s175, %s176
    %p180 = pneg %p174
    %p181 = scmp.eq.s32.totalorder %s13, 3
    %p182 = por %p180, %p181
    %p183 = scmp.ne.s32.totalorder %s175, %s178
    %p184 = scmp.eq.s32.totalorder %s13, 0
    %p185 = por %p183, %p184
    %p186 = scmp.ne.s32.totalorder %s175, %s178
    %p187 = scmp.eq.s32.totalorder %s18, 3
    %p188 = por %p186, %p187
    %p189 = scmp.ne.s32.totalorder %s178, %s179
    %p190 = scmp.eq.s32.totalorder %s18, 0
    %p191 = por %p189, %p190
    %p192 = scmp.ne.s32.totalorder %s178, %s179
    %p193 = scmp.eq.s32.totalorder %s19, 3
    %p194 = por %p192, %p193
    %p196 = scmp.ne.s32.totalorder %s179, %s195
    %p197 = scmp.eq.s32.totalorder %s19, 0
    %p198 = por %p196, %p197
    %p199 = scmp.le.s32.totalorder 1, %s13
    %p200 = scmp.lt.s32.totalorder %s13, 5
    %p201 = pnand %p199, %p200
    %p202 = pneg %p201
    // Predicated region
    $region9: #{tpu_custom_call.1} parent=5 // pred_check
      _
    $region10: #{tpu_custom_call.1} parent=5 // pred_check_branch
      %204 = sbr.rel (%p201) target = $region12
    $region11: #{tpu_custom_call.1} parent=5 // pred_region
      %s205 = ssub.s32 %s13, 1
      // Predicated region
      $region13: #{tpu_custom_call.1} parent=11 // pred_check
        %p206 = pneg %p60
      $region14: #{tpu_custom_call.1} parent=11 // pred_check_branch
        %208 = sbr.rel (%p206) target = $region16
      $region15: #{tpu_custom_call.1} parent=11 // pred_region
        _
      $region16: #{tpu_custom_call.1} parent=11 // pred_fallthru
        _
      // Predicated region
      $region17: #{tpu_custom_call.1} parent=11 // pred_check
        %p209 = pneg %p81
      $region18: #{tpu_custom_call.1} parent=11 // pred_check_branch
        %211 = sbr.rel (%p209) target = $region20
      $region19: #{tpu_custom_call.1} parent=11 // pred_region
        _
      $region20: #{tpu_custom_call.1} parent=11 // pred_fallthru
        _
      // Predicated region
      $region21: #{tpu_custom_call.1} parent=11 // pred_check
        %p212 = pneg %p102
      $region22: #{tpu_custom_call.1} parent=11 // pred_check_branch
        %214 = sbr.rel (%p212) target = $region24
      $region23: #{tpu_custom_call.1} parent=11 // pred_region
        _
      $region24: #{tpu_custom_call.1} parent=11 // pred_fallthru
        _
      // Predicated region
      $region25: #{tpu_custom_call.1} parent=11 // pred_check
        %p215 = pneg %p123
      $region26: #{tpu_custom_call.1} parent=11 // pred_check_branch
        %217 = sbr.rel (%p215) target = $region28
      $region27: #{tpu_custom_call.1} parent=11 // pred_region
        _
      $region28: #{tpu_custom_call.1} parent=11 // pred_fallthru
        _
      // Predicated region
      $region29: #{tpu_custom_call.1} parent=11 // pred_check
        %p218 = pneg %p144
      $region30: #{tpu_custom_call.1} parent=11 // pred_check_branch
        %220 = sbr.rel (%p218) target = $region32
      $region31: #{tpu_custom_call.1} parent=11 // pred_region
        _
      $region32: #{tpu_custom_call.1} parent=11 // pred_fallthru
        _
      // Predicated region
      $region33: #{tpu_custom_call.1} parent=11 // pred_check
        %p221 = pneg %p165
      $region34: #{tpu_custom_call.1} parent=11 // pred_check_branch
        %223 = sbr.rel (%p221) target = $region36
      $region35: #{tpu_custom_call.1} parent=11 // pred_region
        _
      $region36: #{tpu_custom_call.1} parent=11 // pred_fallthru
        _
    $region12: #{tpu_custom_call.1} parent=5 // pred_fallthru
      _
    %p224 = scmp.lt.s32.totalorder %s13, 4
    // Predicated region
    $region37: #{tpu_custom_call.1} parent=5 // pred_check
      %p225 = pneg %p224
    $region38: #{tpu_custom_call.1} parent=5 // pred_check_branch
      %227 = sbr.rel (%p225) target = $region40
    $region39: #{tpu_custom_call.1} parent=5 // pred_region
      // Predicated region
      $region41: #{tpu_custom_call.1} parent=39 // pred_check
        %p228 = pneg %p33
      $region42: #{tpu_custom_call.1} parent=39 // pred_check_branch
        %230 = sbr.rel (%p228) target = $region44
      $region43: #{tpu_custom_call.1} parent=39 // pred_region
        %s231 = smul.u32 16, %s13
        %p232 = scmp.lt.s32.totalorder %s231, 63
        %s233 = scalar_select %p232, %s231, 63
        %s234 = smul.addr %s233, 8
        %s235 = scalar_lea.vmem %s0, %s234
        %s236 = smul.u32 16, %s13
      $region44: #{tpu_custom_call.1} parent=39 // pred_fallthru
        _
    $region40: #{tpu_custom_call.1} parent=5 // pred_fallthru
      _
    %p237 = scmp.le.s32.totalorder 1, %s13
    %p238 = scmp.lt.s32.totalorder %s13, 5
    %p239 = pnand %p237, %p238
    %p240 = pneg %p239
    // Predicated region
    $region45: #{tpu_custom_call.1} parent=5 // pred_check
      _
    $region46: #{tpu_custom_call.1} parent=5 // pred_check_branch
      %242 = sbr.rel (%p239) target = $region48
    $region47: #{tpu_custom_call.1} parent=5 // pred_region
      %s243 = ssub.s32 %s13, 1
      %s244 = smul.u32 16, %s18
      %p245 = scmp.lt.s32.totalorder %s244, 63
      %s246 = scalar_select %p245, %s244, 63
      %s247 = smul.addr %s246, 8
      %s248 = scalar_lea.vmem %s0, %s247
      %p249 = pneg %p39
      %p250 = pneg %p36
      %p251 = pneg %p60
      %p252 = pneg %p57
      %p253 = pneg %p81
      %p254 = pneg %p78
      %p255 = pneg %p102
      %p256 = pneg %p99
      %p257 = pneg %p123
      %p258 = pneg %p120
      %p259 = pneg %p144
      %p260 = pneg %p141
      %p261 = pneg %p165
      %p262 = pneg %p162
      %p263 = pneg %p191
      %p264 = pneg %p188
      %s265 = smul.u32 16, %s18
      %p266 = scmp.lt.s32.totalorder %s265, 63
      %s267 = scalar_select %p266, %s265, 63
      %s268 = smul.addr %s267, 8
      %s269 = scalar_lea.vmem %s7, %s268
      %s270 = smul.u32 16, %s18
      %p271 = scmp.lt.s32.totalorder %s270, 63
      %s272 = scalar_select %p271, %s270, 63
      %s273 = smul.addr %s272, 8
      %s274 = scalar_lea.vmem %s0, %s273
      %s275 = smul.u32 16, %s18
      %s276 = smul.u32 16, %s18
      %p277 = scmp.lt.s32.totalorder %s276, 63
      %s278 = scalar_select %p277, %s276, 63
      %s279 = smul.addr %s278, 8
      %s280 = scalar_lea.vmem %s7, %s279
      %s281 = smul.u32 16, %s18
      %v282 = vld [vmem:[%s274] sm:$0xff]
      %v283 = vld [vmem:[%s274 + $0x8] sm:$0xff]
      %v284 = vld [vmem:[%s274 + $0x10] sm:$0xff]
      %v285 = vld [vmem:[%s274 + $0x18] sm:$0xff]
      %v286 = vld [vmem:[%s274 + $0x20] sm:$0xff]
      %v287 = vld [vmem:[%s274 + $0x28] sm:$0xff]
      %v288 = vld [vmem:[%s274 + $0x30] sm:$0xff]
      %v289 = vld [vmem:[%s274 + $0x38] sm:$0xff]
      %v290 = vld [vmem:[%s274 + $0x40] sm:$0xff]
      %v291 = vld [vmem:[%s274 + $0x48] sm:$0xff]
      %v292 = vld [vmem:[%s274 + $0x50] sm:$0xff]
      %v293 = vld [vmem:[%s274 + $0x58] sm:$0xff]
      %v294 = vld [vmem:[%s274 + $0x60] sm:$0xff]
      %v295 = vld [vmem:[%s274 + $0x68] sm:$0xff]
      %v296 = vld [vmem:[%s274 + $0x70] sm:$0xff]
      %v297 = vld [vmem:[%s274 + $0x78] sm:$0xff]
      %v298 = vld [vmem:[%s1] sm:$0xff]
      %v299 = vld [vmem:[%s1 + $0x8] sm:$0xff]
      %v300 = vld [vmem:[%s2] sm:$0x1]
      %v302 = vperm.slane %v300, 0
      %vm304 = vcmask 130048
      %v306 = vsel %vm304, %v282, 0
      %v309 = vsel %vm304, %v283, 0
      %v312 = vsel %vm304, %v284, 0
      %v315 = vsel %vm304, %v285, 0
      %v318 = vsel %vm304, %v286, 0
      %v321 = vsel %vm304, %v287, 0
      %v324 = vsel %vm304, %v288, 0
      %v327 = vsel %vm304, %v289, 0
      %v330 = vsel %vm304, %v290, 0
      %v333 = vsel %vm304, %v291, 0
      %v336 = vsel %vm304, %v292, 0
      %v339 = vsel %vm304, %v293, 0
      %v342 = vsel %vm304, %v294, 0
      %v345 = vsel %vm304, %v295, 0
      %v348 = vsel %vm304, %v296, 0
      %v351 = vsel %vm304, %v297, 0
      %353 = vmatpush.msra.mxu0 0.0
      %354 = vmatpush.msra.mxu0 0.0
      %355 = vmatpush.msra.mxu0 0.0
      %356 = vmatpush.msra.mxu0 0.0
      %357 = vmatpush.msra.mxu0 0.0
      %358 = vmatpush.msra.mxu0 0.0
      %359 = vmatpush.msra.mxu0 0.0
      %360 = vmatpush.msra.mxu0 0.0
      %361 = vmatpush.msra.mxu0 0.0
      %362 = vmatpush.msra.mxu0 0.0
      %363 = vmatpush.msra.mxu0 0.0
      %364 = vmatpush.msra.mxu0 0.0
      %365 = vmatpush.msra.mxu0 0.0
      %366 = vmatpush.msra.mxu0 0.0
      %367 = vmatpush.msra.mxu0 %v299
      %368 = vmatpush.msra.mxu0 %v298
      %369 = vmatmul.f32.gmra.mxu0 %v306
      %v370 = vpop.f32.mrf.mxu0
      %v371 = vadd.f32 %v302, %v370
      %372 = vmatmul.f32.gmra.mxu0 %v309
      %v373 = vpop.f32.mrf.mxu0
      %v374 = vadd.f32 %v302, %v373
      %375 = vmatmul.f32.gmra.mxu0 %v312
      %v376 = vpop.f32.mrf.mxu0
      %v377 = vadd.f32 %v302, %v376
      %378 = vmatmul.f32.gmra.mxu0 %v315
      %v379 = vpop.f32.mrf.mxu0
      %v380 = vadd.f32 %v302, %v379
      %381 = vmatmul.f32.gmra.mxu0 %v318
      %v382 = vpop.f32.mrf.mxu0
      %v383 = vadd.f32 %v302, %v382
      %384 = vmatmul.f32.gmra.mxu0 %v321
      %v385 = vpop.f32.mrf.mxu0
      %v386 = vadd.f32 %v302, %v385
      %387 = vmatmul.f32.gmra.mxu0 %v324
      %v388 = vpop.f32.mrf.mxu0
      %v389 = vadd.f32 %v302, %v388
      %390 = vmatmul.f32.gmra.mxu0 %v327
      %v391 = vpop.f32.mrf.mxu0
      %v392 = vadd.f32 %v302, %v391
      %393 = vmatmul.f32.gmra.mxu0 %v330
      %v394 = vpop.f32.mrf.mxu0
      %v395 = vadd.f32 %v302, %v394
      %396 = vmatmul.f32.gmra.mxu0 %v333
      %v397 = vpop.f32.mrf.mxu0
      %v398 = vadd.f32 %v302, %v397
      %399 = vmatmul.f32.gmra.mxu0 %v336
      %v400 = vpop.f32.mrf.mxu0
      %v401 = vadd.f32 %v302, %v400
      %402 = vmatmul.f32.gmra.mxu0 %v339
      %v403 = vpop.f32.mrf.mxu0
      %v404 = vadd.f32 %v302, %v403
      %405 = vmatmul.f32.gmra.mxu0 %v342
      %v406 = vpop.f32.mrf.mxu0
      %v407 = vadd.f32 %v302, %v406
      %408 = vmatmul.f32.gmra.mxu0 %v345
      %v409 = vpop.f32.mrf.mxu0
      %v410 = vadd.f32 %v302, %v409
      %411 = vmatmul.f32.gmra.mxu0 %v348
      %v412 = vpop.f32.mrf.mxu0
      %v413 = vadd.f32 %v302, %v412
      %414 = vmatmul.f32.gmra.mxu0 %v351
      %v415 = vpop.f32.mrf.mxu0
      %v416 = vadd.f32 %v302, %v415
      %417 = vdwg.mxu0
      %v418 = vmax.f32 %v371, 0.0
      %v419 = vmax.f32 %v374, 0.0
      %v420 = vmax.f32 %v377, 0.0
      %v421 = vmax.f32 %v380, 0.0
      %v422 = vmax.f32 %v383, 0.0
      %v423 = vmax.f32 %v386, 0.0
      %v424 = vmax.f32 %v389, 0.0
      %v425 = vmax.f32 %v392, 0.0
      %v426 = vmax.f32 %v395, 0.0
      %v427 = vmax.f32 %v398, 0.0
      %v428 = vmax.f32 %v401, 0.0
      %v429 = vmax.f32 %v404, 0.0
      %v430 = vmax.f32 %v407, 0.0
      %v431 = vmax.f32 %v410, 0.0
      %v432 = vmax.f32 %v413, 0.0
      %v433 = vmax.f32 %v416, 0.0
      %v434 = vld [vmem:[%s3] sm:$0xff]
      %v435 = vld [vmem:[%s3 + $0x8] sm:$0xff]
      %v436 = vld [vmem:[%s3 + $0x10] sm:$0xff]
      %v437 = vld [vmem:[%s3 + $0x18] sm:$0xff]
      %v438 = vld [vmem:[%s3 + $0x20] sm:$0xff]
      %v439 = vld [vmem:[%s3 + $0x28] sm:$0xff]
      %v440 = vld [vmem:[%s3 + $0x30] sm:$0xff]
      %v441 = vld [vmem:[%s3 + $0x38] sm:$0xff]
      %v442 = vld [vmem:[%s3 + $0x40] sm:$0xff]
      %v443 = vld [vmem:[%s3 + $0x48] sm:$0xff]
      %v444 = vld [vmem:[%s3 + $0x50] sm:$0xff]
      %v445 = vld [vmem:[%s3 + $0x58] sm:$0xff]
      %v446 = vld [vmem:[%s3 + $0x60] sm:$0xff]
      %v447 = vld [vmem:[%s3 + $0x68] sm:$0xff]
      %v448 = vld [vmem:[%s3 + $0x70] sm:$0xff]
      %v449 = vld [vmem:[%s3 + $0x78] sm:$0xff]
      %v450 = vld [vmem:[%s4] sm:$0x1]
      %v452 = vperm.slane %v450, 0
      %454 = vmatpush.msra.mxu0 %v449
      %455 = vmatpush.msra.mxu0 %v448
      %456 = vmatpush.msra.mxu0 %v447
      %457 = vmatpush.msra.mxu0 %v446
      %458 = vmatpush.msra.mxu0 %v445
      %459 = vmatpush.msra.mxu0 %v444
      %460 = vmatpush.msra.mxu0 %v443
      %461 = vmatpush.msra.mxu0 %v442
      %462 = vmatpush.msra.mxu0 %v441
      %463 = vmatpush.msra.mxu0 %v440
      %464 = vmatpush.msra.mxu0 %v439
      %465 = vmatpush.msra.mxu0 %v438
      %466 = vmatpush.msra.mxu0 %v437
      %467 = vmatpush.msra.mxu0 %v436
      %468 = vmatpush.msra.mxu0 %v435
      %469 = vmatpush.msra.mxu0 %v434
      %470 = vmatmul.f32.gmra.mxu0 %v418
      %v471 = vpop.f32.mrf.mxu0
      %v472 = vadd.f32 %v452, %v471
      %473 = vmatmul.f32.gmra.mxu0 %v419
      %v474 = vpop.f32.mrf.mxu0
      %v475 = vadd.f32 %v452, %v474
      %476 = vmatmul.f32.gmra.mxu0 %v420
      %v477 = vpop.f32.mrf.mxu0
      %v478 = vadd.f32 %v452, %v477
      %479 = vmatmul.f32.gmra.mxu0 %v421
      %v480 = vpop.f32.mrf.mxu0
      %v481 = vadd.f32 %v452, %v480
      %482 = vmatmul.f32.gmra.mxu0 %v422
      %v483 = vpop.f32.mrf.mxu0
      %v484 = vadd.f32 %v452, %v483
      %485 = vmatmul.f32.gmra.mxu0 %v423
      %v486 = vpop.f32.mrf.mxu0
      %v487 = vadd.f32 %v452, %v486
      %488 = vmatmul.f32.gmra.mxu0 %v424
      %v489 = vpop.f32.mrf.mxu0
      %v490 = vadd.f32 %v452, %v489
      %491 = vmatmul.f32.gmra.mxu0 %v425
      %v492 = vpop.f32.mrf.mxu0
      %v493 = vadd.f32 %v452, %v492
      %494 = vmatmul.f32.gmra.mxu0 %v426
      %v495 = vpop.f32.mrf.mxu0
      %v496 = vadd.f32 %v452, %v495
      %497 = vmatmul.f32.gmra.mxu0 %v427
      %v498 = vpop.f32.mrf.mxu0
      %v499 = vadd.f32 %v452, %v498
      %500 = vmatmul.f32.gmra.mxu0 %v428
      %v501 = vpop.f32.mrf.mxu0
      %v502 = vadd.f32 %v452, %v501
      %503 = vmatmul.f32.gmra.mxu0 %v429
      %v504 = vpop.f32.mrf.mxu0
      %v505 = vadd.f32 %v452, %v504
      %506 = vmatmul.f32.gmra.mxu0 %v430
      %v507 = vpop.f32.mrf.mxu0
      %v508 = vadd.f32 %v452, %v507
      %509 = vmatmul.f32.gmra.mxu0 %v431
      %v510 = vpop.f32.mrf.mxu0
      %v511 = vadd.f32 %v452, %v510
      %512 = vmatmul.f32.gmra.mxu0 %v432
      %v513 = vpop.f32.mrf.mxu0
      %v514 = vadd.f32 %v452, %v513
      %515 = vmatmul.f32.gmra.mxu0 %v433
      %v516 = vpop.f32.mrf.mxu0
      %v517 = vadd.f32 %v452, %v516
      %518 = vdwg.mxu0
      %v519 = vmax.f32 %v472, 0.0
      %v520 = vmax.f32 %v475, 0.0
      %v521 = vmax.f32 %v478, 0.0
      %v522 = vmax.f32 %v481, 0.0
      %v523 = vmax.f32 %v484, 0.0
      %v524 = vmax.f32 %v487, 0.0
      %v525 = vmax.f32 %v490, 0.0
      %v526 = vmax.f32 %v493, 0.0
      %v527 = vmax.f32 %v496, 0.0
      %v528 = vmax.f32 %v499, 0.0
      %v529 = vmax.f32 %v502, 0.0
      %v530 = vmax.f32 %v505, 0.0
      %v531 = vmax.f32 %v508, 0.0
      %v532 = vmax.f32 %v511, 0.0
      %v533 = vmax.f32 %v514, 0.0
      %v534 = vmax.f32 %v517, 0.0
      %v535 = vld [vmem:[%s5] sm:$0xff]
      %v536 = vld [vmem:[%s5 + $0x8] sm:$0xff]
      %v537 = vld [vmem:[%s5 + $0x10] sm:$0xff]
      %v538 = vld [vmem:[%s5 + $0x18] sm:$0xff]
      %v539 = vld [vmem:[%s5 + $0x20] sm:$0xff]
      %v540 = vld [vmem:[%s5 + $0x28] sm:$0xff]
      %v541 = vld [vmem:[%s5 + $0x30] sm:$0xff]
      %v542 = vld [vmem:[%s5 + $0x38] sm:$0xff]
      %v543 = vld [vmem:[%s5 + $0x40] sm:$0xff]
      %v544 = vld [vmem:[%s5 + $0x48] sm:$0xff]
      %v545 = vld [vmem:[%s5 + $0x50] sm:$0xff]
      %v546 = vld [vmem:[%s5 + $0x58] sm:$0xff]
      %v547 = vld [vmem:[%s5 + $0x60] sm:$0xff]
      %v548 = vld [vmem:[%s5 + $0x68] sm:$0xff]
      %v549 = vld [vmem:[%s5 + $0x70] sm:$0xff]
      %v550 = vld [vmem:[%s5 + $0x78] sm:$0xff]
      %v551 = vld [vmem:[%s6] sm:$0x1]
      %v553 = vperm.slane %v551, 0
      %555 = vmatpush.msra.mxu0 %v550
      %556 = vmatpush.msra.mxu0 %v549
      %557 = vmatpush.msra.mxu0 %v548
      %558 = vmatpush.msra.mxu0 %v547
      %559 = vmatpush.msra.mxu0 %v546
      %560 = vmatpush.msra.mxu0 %v545
      %561 = vmatpush.msra.mxu0 %v544
      %562 = vmatpush.msra.mxu0 %v543
      %563 = vmatpush.msra.mxu0 %v542
      %564 = vmatpush.msra.mxu0 %v541
      %565 = vmatpush.msra.mxu0 %v540
      %566 = vmatpush.msra.mxu0 %v539
      %567 = vmatpush.msra.mxu0 %v538
      %568 = vmatpush.msra.mxu0 %v537
      %569 = vmatpush.msra.mxu0 %v536
      %570 = vmatpush.msra.mxu0 %v535
      %571 = vmatmul.f32.gmra.mxu0 %v519
      %v572 = vpop.f32.mrf.mxu0
      %v573 = vadd.f32 %v553, %v572
      %574 = vmatmul.f32.gmra.mxu0 %v520
      %v575 = vpop.f32.mrf.mxu0
      %v576 = vadd.f32 %v553, %v575
      %577 = vmatmul.f32.gmra.mxu0 %v521
      %v578 = vpop.f32.mrf.mxu0
      %v579 = vadd.f32 %v553, %v578
      %580 = vmatmul.f32.gmra.mxu0 %v522
      %v581 = vpop.f32.mrf.mxu0
      %v582 = vadd.f32 %v553, %v581
      %583 = vmatmul.f32.gmra.mxu0 %v523
      %v584 = vpop.f32.mrf.mxu0
      %v585 = vadd.f32 %v553, %v584
      %586 = vmatmul.f32.gmra.mxu0 %v524
      %v587 = vpop.f32.mrf.mxu0
      %v588 = vadd.f32 %v553, %v587
      %589 = vmatmul.f32.gmra.mxu0 %v525
      %v590 = vpop.f32.mrf.mxu0
      %v591 = vadd.f32 %v553, %v590
      %592 = vmatmul.f32.gmra.mxu0 %v526
      %v593 = vpop.f32.mrf.mxu0
      %v594 = vadd.f32 %v553, %v593
      %595 = vmatmul.f32.gmra.mxu0 %v527
      %v596 = vpop.f32.mrf.mxu0
      %v597 = vadd.f32 %v553, %v596
      %598 = vmatmul.f32.gmra.mxu0 %v528
      %v599 = vpop.f32.mrf.mxu0
      %v600 = vadd.f32 %v553, %v599
      %601 = vmatmul.f32.gmra.mxu0 %v529
      %v602 = vpop.f32.mrf.mxu0
      %v603 = vadd.f32 %v553, %v602
      %604 = vmatmul.f32.gmra.mxu0 %v530
      %v605 = vpop.f32.mrf.mxu0
      %v606 = vadd.f32 %v553, %v605
      %607 = vmatmul.f32.gmra.mxu0 %v531
      %v608 = vpop.f32.mrf.mxu0
      %v609 = vadd.f32 %v553, %v608
      %610 = vmatmul.f32.gmra.mxu0 %v532
      %v611 = vpop.f32.mrf.mxu0
      %v612 = vadd.f32 %v553, %v611
      %613 = vmatmul.f32.gmra.mxu0 %v533
      %v614 = vpop.f32.mrf.mxu0
      %v615 = vadd.f32 %v553, %v614
      %616 = vmatmul.f32.gmra.mxu0 %v534
      %v617 = vpop.f32.mrf.mxu0
      %v618 = vadd.f32 %v553, %v617
      %619 = vdwg.mxu0
      %v620 = vadd.f32 %v573, %v282
      %v621 = vadd.f32 %v576, %v283
      %v622 = vadd.f32 %v579, %v284
      %v623 = vadd.f32 %v582, %v285
      %v624 = vadd.f32 %v585, %v286
      %v625 = vadd.f32 %v588, %v287
      %v626 = vadd.f32 %v591, %v288
      %v627 = vadd.f32 %v594, %v289
      %v628 = vadd.f32 %v597, %v290
      %v629 = vadd.f32 %v600, %v291
      %v630 = vadd.f32 %v603, %v292
      %v631 = vadd.f32 %v606, %v293
      %v632 = vadd.f32 %v609, %v294
      %v633 = vadd.f32 %v612, %v295
      %v634 = vadd.f32 %v615, %v296
      %v635 = vadd.f32 %v618, %v297
      %v636 = vmax.f32 %v620, 0.0
      %v637 = vmax.f32 %v621, 0.0
      %v638 = vmax.f32 %v622, 0.0
      %v639 = vmax.f32 %v623, 0.0
      %v640 = vmax.f32 %v624, 0.0
      %v641 = vmax.f32 %v625, 0.0
      %v642 = vmax.f32 %v626, 0.0
      %v643 = vmax.f32 %v627, 0.0
      %v644 = vmax.f32 %v628, 0.0
      %v645 = vmax.f32 %v629, 0.0
      %v646 = vmax.f32 %v630, 0.0
      %v647 = vmax.f32 %v631, 0.0
      %v648 = vmax.f32 %v632, 0.0
      %v649 = vmax.f32 %v633, 0.0
      %v650 = vmax.f32 %v634, 0.0
      %v651 = vmax.f32 %v635, 0.0
      %652 = vst.msk [vmem:[%s280] sm:$0xff] %vm304, %v636
      %653 = vst.msk [vmem:[%s280 + $0x8] sm:$0xff] %vm304, %v637
      %654 = vst.msk [vmem:[%s280 + $0x10] sm:$0xff] %vm304, %v638
      %655 = vst.msk [vmem:[%s280 + $0x18] sm:$0xff] %vm304, %v639
      %656 = vst.msk [vmem:[%s280 + $0x20] sm:$0xff] %vm304, %v640
      %657 = vst.msk [vmem:[%s280 + $0x28] sm:$0xff] %vm304, %v641
      %658 = vst.msk [vmem:[%s280 + $0x30] sm:$0xff] %vm304, %v642
      %659 = vst.msk [vmem:[%s280 + $0x38] sm:$0xff] %vm304, %v643
      %660 = vst.msk [vmem:[%s280 + $0x40] sm:$0xff] %vm304, %v644
      %661 = vst.msk [vmem:[%s280 + $0x48] sm:$0xff] %vm304, %v645
      %662 = vst.msk [vmem:[%s280 + $0x50] sm:$0xff] %vm304, %v646
      %663 = vst.msk [vmem:[%s280 + $0x58] sm:$0xff] %vm304, %v647
      %664 = vst.msk [vmem:[%s280 + $0x60] sm:$0xff] %vm304, %v648
      %665 = vst.msk [vmem:[%s280 + $0x68] sm:$0xff] %vm304, %v649
      %666 = vst.msk [vmem:[%s280 + $0x70] sm:$0xff] %vm304, %v650
      %667 = vst.msk [vmem:[%s280 + $0x78] sm:$0xff] %vm304, %v651
      %s668 = smul.u32 16, %s18
      %p669 = scmp.lt.s32.totalorder %s668, 63
      %s670 = scalar_select %p669, %s668, 63
      %s671 = smul.addr %s670, 8
      %s672 = scalar_lea.vmem %s7, %s671
      // Predicated region
      $region49: #{tpu_custom_call.1} parent=47 // pred_check
        %p673 = pneg %p188
      $region50: #{tpu_custom_call.1} parent=47 // pred_check_branch
        %675 = sbr.rel (%p673) target = $region52
      $region51: #{tpu_custom_call.1} parent=47 // pred_region
        %s676 = smul.u32 16, %s18
      $region52: #{tpu_custom_call.1} parent=47 // pred_fallthru
        _
    $region48: #{tpu_custom_call.1} parent=5 // pred_fallthru
      _
    %p677 = scmp.le.s32.totalorder 2, %s13
    // Predicated region
    $region53: #{tpu_custom_call.1} parent=5 // pred_check
      %p678 = pneg %p677
    $region54: #{tpu_custom_call.1} parent=5 // pred_check_branch
      %680 = sbr.rel (%p678) target = $region56
    $region55: #{tpu_custom_call.1} parent=5 // pred_region
      %s681 = ssub.s32 %s13, 2
      // Predicated region
      $region57: #{tpu_custom_call.1} parent=55 // pred_check
        %p682 = pneg %p194
      $region58: #{tpu_custom_call.1} parent=55 // pred_check_branch
        %684 = sbr.rel (%p682) target = $region60
      $region59: #{tpu_custom_call.1} parent=55 // pred_region
        %s685 = smul.u32 16, %s19
        %p686 = scmp.lt.s32.totalorder %s685, 63
        %s687 = scalar_select %p686, %s685, 63
        %s688 = smul.addr %s687, 8
        %s689 = scalar_lea.vmem %s7, %s688
      $region60: #{tpu_custom_call.1} parent=55 // pred_fallthru
        _
    $region56: #{tpu_custom_call.1} parent=5 // pred_fallthru
      _
  $region6: #{tpu_custom_call.1} parent=0 // loop_footer
    %s17 = sadd.s32 1, %s13
  $region7: #{tpu_custom_call.1} parent=0 // loop_footer_branch
    %12 = sbr.rel target = $region3
  $region8: #{tpu_custom_call.1} parent=0 // loop_exit
    _

</llo_original>
